<compile_context>
chip_gen: v7x
topology: tpu7x:2x2x1
jax: 0.10.0
libtpu: 0.0.40
codegen_flags: <defaults>
</compile_context>

<pallas_src>
import numpy as np
import jax
import jax.numpy as jnp
from jax import lax
from jax.experimental import pallas as pl
from jax.experimental.pallas import tpu as pltpu

BN_EPS = 1e-5


# ----------------------------- Pallas kernel --------------------------------
def _skip_basic_kernel(w_ref, p_ref, b_ref, o_ref):
    """Fused skip_basic block for one parameter set (all batch elements).

    w_ref : (1, Cout, K)      BN-folded block weight (4 dilated convs + skip)
    p_ref : (1, K, N*H*W)     im2col patches (channel/tap rows, pixel columns)
    b_ref : (1, Cout, 1)      merged bias (dilated-BN bias + skip-BN bias)
    o_ref : (1, Cout, N*H*W)  output (channel-major, lane-dense)
    """
    acc = jnp.dot(w_ref[0], p_ref[0], preferred_element_type=jnp.float32)
    o_ref[0] = jnp.maximum(acc + b_ref[0], 0.0).astype(o_ref.dtype)


# ------------------------------- wrappers ------------------------------------
def _fused_group_apply(xs_nchw, params_list, dilations):
    """Applies skip_basic to a group of same-shaped inputs, one per param set.

    Returns a list of NCHW outputs (one per input / parameter set).
    """
    S = len(xs_nchw)
    N, Cin, H, W = xs_nchw[0].shape
    Cout = params_list[0]["w_skip"].shape[-1]
    Cq = Cout // 4
    pad = max(dilations)
    NHW = N * H * W

    # tap groups: group 0 = shared centre tap (also carries the 1x1 skip conv),
    # then 8 off-centre taps per dilation branch.
    offsets = [(0, 0)]
    for d in dilations:
        for ky in range(3):
            for kx in range(3):
                if ky == 1 and kx == 1:
                    continue
                offsets.append(((ky - 1) * d, (kx - 1) * d))
    G = len(offsets)                      # 1 + 8 * num_branches
    K = G * Cin

    # ---- im2col (host-side XLA): lane-dense RHS operand (S, K, N*H*W) ----
    x = jnp.stack(xs_nchw, 0).astype(jnp.float32)                # (S,N,Cin,H,W)
    xp = jnp.pad(x, ((0, 0), (0, 0), (0, 0), (pad, pad), (pad, pad)))
    cols = jnp.stack(
        [xp[:, :, :, pad + dy:pad + dy + H, pad + dx:pad + dx + W]
         for dy, dx in offsets],
        axis=2)                                                  # (S,N,G,Cin,H,W)
    patches = jnp.transpose(cols, (0, 2, 3, 1, 4, 5)).reshape(S, K, NHW)

    # ---- fold BN into weights, merge biases, build block weight (Cout, K) ----
    w_list, b_list = [], []
    for p in params_list:
        dsc = p["dil_scale"]
        ssc = p["skip_scale"]
        w_big = jnp.zeros((K, Cout), jnp.float32)
        center = p["w_skip"] * ssc[None, :]                      # (Cin, Cout)
        g = 1
        for b, _ in enumerate(dilations):
            wb = p["w_br"][b] * dsc[b * Cq:(b + 1) * Cq][None, None, None, :]
            center = center.at[:, b * Cq:(b + 1) * Cq].add(wb[1, 1])
            for ky in range(3):
                for kx in range(3):
                    if ky == 1 and kx == 1:
                        continue
                    w_big = w_big.at[g * Cin:(g + 1) * Cin,
                                     b * Cq:(b + 1) * Cq].set(wb[ky, kx])
                    g += 1
        w_big = w_big.at[0:Cin, :].set(center)
        w_list.append(w_big.T)                                   # (Cout, K)
        b_list.append((p["dil_bias"] + p["skip_bias"]).reshape(Cout, 1))

    w_all = jnp.stack(w_list, 0)                                 # (S, Cout, K)
    b_all = jnp.stack(b_list, 0)                                 # (S, Cout, 1)

    out = pl.pallas_call(
        _skip_basic_kernel,
        out_shape=jax.ShapeDtypeStruct((S, Cout, NHW), jnp.float32),
        grid=(S,),
        in_specs=[
            pl.BlockSpec((1, Cout, K), lambda s: (s, 0, 0)),
            pl.BlockSpec((1, K, NHW), lambda s: (s, 0, 0)),
            pl.BlockSpec((1, Cout, 1), lambda s: (s, 0, 0)),
        ],
        out_specs=pl.BlockSpec((1, Cout, NHW), lambda s: (s, 0, 0)),
        compiler_params=pltpu.CompilerParams(
            dimension_semantics=("parallel",)),
    )(w_all, patches, b_all)

    # (S, Cout, N*H*W) -> (S, N, Cout, H, W)  (already channel-major -> NCHW)
    out = jnp.transpose(out.reshape(S, Cout, N, H, W), (0, 2, 1, 3, 4))
    return [out[s] for s in range(S)]


def skip_basic_apply(x_nchw, params, dilations):
    """Single skip_basic block (NCHW in / NCHW out)."""
    return _fused_group_apply([x_nchw], [params], list(dilations))[0]


def left_to_right_apply(levels, params_list, dilations_list):
    return tuple(skip_basic_apply(x, p, dd)
                 for x, p, dd in zip(levels, params_list, dilations_list))


def skip1_apply(r_levels, d_levels, r_params, d_params, dilations_list):
    """Full skip1 forward; same-shaped blocks share one pallas_call."""
    items = (list(zip(r_levels, r_params, dilations_list))
             + list(zip(d_levels, d_params, dilations_list)))

    groups = {}
    for idx, (x, p, dd) in enumerate(items):
        sig = (tuple(x.shape), int(p["w_skip"].shape[-1]), tuple(dd))
        groups.setdefault(sig, []).append(idx)

    outs = [None] * len(items)
    for idxs in groups.values():
        xs = [items[i][0] for i in idxs]
        ps = [items[i][1] for i in idxs]
        dd = list(items[idxs[0]][2])
        group_outs = _fused_group_apply(xs, ps, dd)
        for j, i in enumerate(idxs):
            outs[i] = group_outs[j]
    return tuple(outs)


# --------------------------- parameter construction --------------------------
def _fold_bn(key, c):
    kg, kb, km, kv = jax.random.split(key, 4)
    gamma = jax.random.uniform(kg, (c,), jnp.float32, 0.5, 1.5)
    beta = 0.1 * jax.random.normal(kb, (c,), jnp.float32)
    mean = 0.1 * jax.random.normal(km, (c,), jnp.float32)
    var = jax.random.uniform(kv, (c,), jnp.float32, 0.5, 1.5)
    scale = gamma * lax.rsqrt(var + BN_EPS)
    bias = beta - mean * scale
    return scale, bias


def make_skip_basic_params(key, cin, cout):
    cq = cout // 4
    keys = jax.random.split(key, 7)
    w_br = [0.1 * jax.random.normal(keys[i], (3, 3, cin, cq), jnp.float32)
            for i in range(4)]                               # HWIO
    w_skip = 0.1 * jax.random.normal(keys[4], (cin, cout), jnp.float32)
    dil_scale, dil_bias = _fold_bn(keys[5], cout)
    skip_scale, skip_bias = _fold_bn(keys[6], cout)
    return dict(w_br=w_br, w_skip=w_skip,
                dil_scale=dil_scale, dil_bias=dil_bias,
                skip_scale=skip_scale, skip_bias=skip_bias)


# ------------------------------ pure-JAX reference ---------------------------
def skip_basic_ref(x_nchw, params, dilations):
    x = jnp.transpose(x_nchw, (0, 2, 3, 1)).astype(jnp.float32)
    cin = x.shape[-1]
    cout = params["w_skip"].shape[-1]
    outs = []
    for w, d in zip(params["w_br"], dilations):
        o = lax.conv_general_dilated(
            x, w, window_strides=(1, 1), padding=((d, d), (d, d)),
            rhs_dilation=(d, d),
            dimension_numbers=("NHWC", "HWIO", "NHWC"),
            precision=lax.Precision.HIGHEST)
        outs.append(o)
    dil = jnp.concatenate(outs, -1) * params["dil_scale"] + params["dil_bias"]
    skip = lax.conv_general_dilated(
        x, params["w_skip"].reshape(1, 1, cin, cout), (1, 1), "VALID",
        dimension_numbers=("NHWC", "HWIO", "NHWC"),
        precision=lax.Precision.HIGHEST)
    skip = skip * params["skip_scale"] + params["skip_bias"]
    out = jnp.maximum(dil + skip, 0.0)
    return jnp.transpose(out, (0, 3, 1, 2))


# ----------------------------------- main -------------------------------------
if __name__ == "__main__":
    # small, module-consistent configuration: 5 pyramid levels per branch
    in_channels = [4, 4, 8, 8, 8]
    out_channels = [8, 8, 16, 16, 16]     # each divisible by 4
    spatial = [16, 16, 8, 8, 8]
    d = [[1, 3, 5, 7]] * 5
    batch = 2

    root = jax.random.PRNGKey(0)
    k_params, k_inputs = jax.random.split(root)

    pkeys = jax.random.split(k_params, 10)
    r_params = [make_skip_basic_params(pkeys[i], in_channels[i], out_channels[i])
                for i in range(5)]
    d_params = [make_skip_basic_params(pkeys[5 + i], in_channels[i], out_channels[i])
                for i in range(5)]

    ikeys = jax.random.split(k_inputs, 10)
    r_levels = [jax.random.normal(
        ikeys[i], (batch, in_channels[i], spatial[i], spatial[i]), jnp.float32)
        for i in range(5)]
    d_levels = [jax.random.normal(
        ikeys[5 + i], (batch, in_channels[i], spatial[i], spatial[i]), jnp.float32)
        for i in range(5)]

    outs = skip1_apply(r_levels, d_levels, r_params, d_params, d)
    outs = jax.block_until_ready(outs)

    # validate against a pure-JAX reference of the same forward pass
    refs = tuple(skip_basic_ref(x, p, dd) for x, p, dd in
                 list(zip(r_levels, r_params, d)) + list(zip(d_levels, d_params, d)))
    for i, (o, r) in enumerate(zip(outs, refs)):
        assert o.shape == r.shape, (i, o.shape, r.shape)
        np.testing.assert_allclose(np.asarray(o), np.asarray(r),
                                   rtol=2e-4, atol=2e-4)

    print("KERNEL_OK")
</pallas_src>

<mosaic_0001>
module attributes {stable_mosaic.version = 11 : i64} {
  func.func @_skip_basic_kernel(%arg0: i32, %arg1: memref<1x8x132xf32, #tpu.memory_space<vmem>>, %arg2: memref<1x132x512xf32, #tpu.memory_space<vmem>>, %arg3: memref<1x8x1xf32, #tpu.memory_space<vmem>>, %arg4: memref<1x8x512xf32, #tpu.memory_space<vmem>>) attributes {dimension_semantics = [#tpu.dimension_semantics<parallel>], iteration_bounds = array<i64: 4>, scalar_prefetch = 0 : i64, scratch_operands = 0 : i64, tpu.core_type = #tpu.core_type<tc>, window_params = [{transform_indices = @transform_0, window_bounds = array<i64: 1, 8, 132>}, {transform_indices = @transform_1, window_bounds = array<i64: 1, 132, 512>}, {transform_indices = @transform_2, window_bounds = array<i64: 1, 8, 1>}, {transform_indices = @transform_3, window_bounds = array<i64: 1, 8, 512>}]} {
    %c0 = arith.constant 0 : index
    %c0_0 = arith.constant 0 : index
    %c0_1 = arith.constant 0 : index
    %0 = vector.load %arg1[%c0, %c0_0, %c0_1] : memref<1x8x132xf32, #tpu.memory_space<vmem>>, vector<1x8x132xf32>
    %1 = vector.shape_cast %0 : vector<1x8x132xf32> to vector<8x132xf32>
    %c0_2 = arith.constant 0 : index
    %c0_3 = arith.constant 0 : index
    %c0_4 = arith.constant 0 : index
    %2 = vector.load %arg2[%c0_2, %c0_3, %c0_4] : memref<1x132x512xf32, #tpu.memory_space<vmem>>, vector<1x132x512xf32>
    %3 = vector.shape_cast %2 : vector<1x132x512xf32> to vector<132x512xf32>
    %cst = arith.constant dense<0.000000e+00> : vector<8x512xf32>
    %4 = tpu.matmul %1, %3, %cst {dimension_numbers = #tpu.dot_dimension_numbers<[1], [0], [0], [1], [0, 0, 1, 1], [], []>} : vector<8x132xf32>, vector<132x512xf32>, vector<8x512xf32> -> vector<8x512xf32>
    %c0_5 = arith.constant 0 : index
    %c0_6 = arith.constant 0 : index
    %c0_7 = arith.constant 0 : index
    %5 = vector.load %arg3[%c0_5, %c0_6, %c0_7] : memref<1x8x1xf32, #tpu.memory_space<vmem>>, vector<1x8x1xf32>
    %6 = vector.shape_cast %5 : vector<1x8x1xf32> to vector<8x1xf32>
    %7 = vector.broadcast %6 : vector<8x1xf32> to vector<8x512xf32>
    %8 = arith.addf %4, %7 : vector<8x512xf32>
    %cst_8 = arith.constant 0.000000e+00 : f32
    %9 = vector.broadcast %cst_8 : f32 to vector<8x512xf32>
    %10 = arith.maximumf %8, %9 : vector<8x512xf32>
    %c0_9 = arith.constant 0 : index
    %c0_10 = arith.constant 0 : index
    %c0_11 = arith.constant 0 : index
    %11 = vector.load %arg4[%c0_9, %c0_10, %c0_11] : memref<1x8x512xf32, #tpu.memory_space<vmem>>, vector<1x8x512xf32>
    %12 = vector.shape_cast %11 : vector<1x8x512xf32> to vector<8x512xf32>
    %13 = vector.shape_cast %10 : vector<8x512xf32> to vector<1x8x512xf32>
    tpu.vector_store %arg4[%c0_9, %c0_10, %c0_11], %13 {strides = array<i32>} : memref<1x8x512xf32, #tpu.memory_space<vmem>>, vector<1x8x512xf32>,
    return
  }
  func.func @transform_0(%arg0: i32) -> (i32, i32, i32) {
    %c0_i32 = arith.constant 0 : i32
    %c0_i32_0 = arith.constant 0 : i32
    %c0_i32_1 = arith.constant 0 : i32
    return %arg0, %c0_i32, %c0_i32_0 : i32, i32, i32
  }
  func.func @transform_1(%arg0: i32) -> (i32, i32, i32) {
    %c0_i32 = arith.constant 0 : i32
    %c0_i32_0 = arith.constant 0 : i32
    %c0_i32_1 = arith.constant 0 : i32
    return %arg0, %c0_i32, %c0_i32_0 : i32, i32, i32
  }
  func.func @transform_2(%arg0: i32) -> (i32, i32, i32) {
    %c0_i32 = arith.constant 0 : i32
    %c0_i32_0 = arith.constant 0 : i32
    %c0_i32_1 = arith.constant 0 : i32
    return %arg0, %c0_i32, %c0_i32_0 : i32, i32, i32
  }
  func.func @transform_3(%arg0: i32) -> (i32, i32, i32) {
    %c0_i32 = arith.constant 0 : i32
    %c0_i32_0 = arith.constant 0 : i32
    %c0_i32_1 = arith.constant 0 : i32
    return %arg0, %c0_i32, %c0_i32_0 : i32, i32, i32
  }
}

</mosaic_0001>

<llo_original>
// kernel: tpu_custom_call.1
$region0: #{tpu_custom_call.1}
  #allocation0 [shape = 'u32[]', space=smem, size = 0x4, offset = 0x4, fixed_abs, tag = 'smem constant byte address 0x4 - core index']
  #allocation1 [shape = 'u32[144,128]{1,0:T(1,128)}', space=vmem, size = 0x12000, scoped, tag = 'internal scratch']
  %s0 = inlined_call_operand.vmem [shape: f32[4,8,132], index: 0, kind: input, shape index: {}]
  %s1 = inlined_call_operand.vmem [shape: f32[4,132,512], index: 1, kind: input, shape index: {}]
  %s2 = inlined_call_operand.vmem [shape: f32[4,8,1], index: 2, kind: input, shape index: {}]
  %s3 = inlined_call_operand.hbm [shape: f32[4,8,512], index: 3, kind: output, shape index: {}]
  %s4 = sld [smem:[#allocation0]]
  $region45: #{tpu_custom_call.1} parent=0
    _
  %s6 = ssub.s32 1, %s4
  %s7 = scalar_select 0, %s6, %s4
  $region1: #{tpu_custom_call.1} parent=0
    #allocation2 [shape = 'u8[32768]{0}', space=vmem, size = 0x8000, scoped, tag = 'output window, operand 0']
    #allocation3 [shape = 's32[2]{0}', space=sflag, size = 0x8, scoped, tag = 'scoped memory for tpu_custom_call.1']
    %8 = vsyncpa [#allocation3], 0
    %s9 = scalar_lea.sflag [#allocation3], 1
    %10 = vsyncpa %s9, 0
    loop: start=0, step=1, limit=6
    $region2: #{tpu_custom_call.1} parent=1 // loop_pre_header
      _
    $region3: #{tpu_custom_call.1} parent=1 // loop_header
      %s12 = sphi 0, %s16
      %p13 = scmp.ge.s32.totalorder %s12, 6
      %s22 = sphi 0, %s24
      %s25 = sphi 0, %s22
      %s26 = sphi 0, %s25
      %s42 = sphi 0, %s26
      %s48 = sphi 0, %s50
      %s51 = sphi 0, %s48
      %s52 = sphi 0, %s51
      %s68 = sphi 0, %s52
      %s74 = sphi 0, %s76
      %s77 = sphi 0, %s74
      %s78 = sphi 0, %s77
      %s94 = sphi 0, %s78
      %s100 = sphi 0, %s102
      %s103 = sphi 0, %s100
      %s104 = sphi 0, %s103
      %s120 = sphi 0, %s104
    $region4: #{tpu_custom_call.1} parent=1 // loop_header_branch
      %15 = sbr.rel (%p13) target = $region8
    $region5: #{tpu_custom_call.1} parent=1 // loop_body
      %s17 = ssub.s32 %s12, 1
      %s18 = ssub.s32 %s12, 2
      %s19 = sadd.s32 %s12, 1
      %s20 = ssub.s32 %s12, %s19
      %p21 = scmp.eq.s32.totalorder %s20, 0
      %s23 = sadd.s32 %s22, 1
      %s24 = scalar_select %p21, %s22, %s23
      %p27 = pneg %p21
      %p28 = scmp.eq.s32.totalorder %s12, 3
      %p29 = por %p27, %p28
      %p30 = scmp.ne.s32.totalorder %s22, %s25
      %p31 = scmp.eq.s32.totalorder %s12, 0
      %p32 = por %p30, %p31
      %p33 = scmp.ne.s32.totalorder %s22, %s25
      %p34 = scmp.eq.s32.totalorder %s17, 3
      %p35 = por %p33, %p34
      %p36 = scmp.ne.s32.totalorder %s25, %s26
      %p37 = scmp.eq.s32.totalorder %s17, 0
      %p38 = por %p36, %p37
      %p39 = scmp.ne.s32.totalorder %s25, %s26
      %p40 = scmp.eq.s32.totalorder %s18, 3
      %p41 = por %p39, %p40
      %p43 = scmp.ne.s32.totalorder %s26, %s42
      %p44 = scmp.eq.s32.totalorder %s18, 0
      %p45 = por %p43, %p44
      %s46 = ssub.s32 %s12, %s19
      %p47 = scmp.eq.s32.totalorder %s46, 0
      %s49 = sadd.s32 %s48, 1
      %s50 = scalar_select %p47, %s48, %s49
      %p53 = pneg %p47
      %p54 = scmp.eq.s32.totalorder %s12, 3
      %p55 = por %p53, %p54
      %p56 = scmp.ne.s32.totalorder %s48, %s51
      %p57 = scmp.eq.s32.totalorder %s12, 0
      %p58 = por %p56, %p57
      %p59 = scmp.ne.s32.totalorder %s48, %s51
      %p60 = scmp.eq.s32.totalorder %s17, 3
      %p61 = por %p59, %p60
      %p62 = scmp.ne.s32.totalorder %s51, %s52
      %p63 = scmp.eq.s32.totalorder %s17, 0
      %p64 = por %p62, %p63
      %p65 = scmp.ne.s32.totalorder %s51, %s52
      %p66 = scmp.eq.s32.totalorder %s18, 3
      %p67 = por %p65, %p66
      %p69 = scmp.ne.s32.totalorder %s52, %s68
      %p70 = scmp.eq.s32.totalorder %s18, 0
      %p71 = por %p69, %p70
      %s72 = ssub.s32 %s12, %s19
      %p73 = scmp.eq.s32.totalorder %s72, 0
      %s75 = sadd.s32 %s74, 1
      %s76 = scalar_select %p73, %s74, %s75
      %p79 = pneg %p73
      %p80 = scmp.eq.s32.totalorder %s12, 3
      %p81 = por %p79, %p80
      %p82 = scmp.ne.s32.totalorder %s74, %s77
      %p83 = scmp.eq.s32.totalorder %s12, 0
      %p84 = por %p82, %p83
      %p85 = scmp.ne.s32.totalorder %s74, %s77
      %p86 = scmp.eq.s32.totalorder %s17, 3
      %p87 = por %p85, %p86
      %p88 = scmp.ne.s32.totalorder %s77, %s78
      %p89 = scmp.eq.s32.totalorder %s17, 0
      %p90 = por %p88, %p89
      %p91 = scmp.ne.s32.totalorder %s77, %s78
      %p92 = scmp.eq.s32.totalorder %s18, 3
      %p93 = por %p91, %p92
      %p95 = scmp.ne.s32.totalorder %s78, %s94
      %p96 = scmp.eq.s32.totalorder %s18, 0
      %p97 = por %p95, %p96
      %s98 = ssub.s32 %s12, %s19
      %p99 = scmp.eq.s32.totalorder %s98, 0
      %s101 = sadd.s32 %s100, 1
      %s102 = scalar_select %p99, %s100, %s101
      %p105 = pneg %p99
      %p106 = scmp.eq.s32.totalorder %s12, 3
      %p107 = por %p105, %p106
      %p108 = scmp.ne.s32.totalorder %s100, %s103
      %p109 = scmp.eq.s32.totalorder %s12, 0
      %p110 = por %p108, %p109
      %p111 = scmp.ne.s32.totalorder %s100, %s103
      %p112 = scmp.eq.s32.totalorder %s17, 3
      %p113 = por %p111, %p112
      %p114 = scmp.ne.s32.totalorder %s103, %s104
      %p115 = scmp.eq.s32.totalorder %s17, 0
      %p116 = por %p114, %p115
      %p117 = scmp.ne.s32.totalorder %s103, %s104
      %p118 = scmp.eq.s32.totalorder %s18, 3
      %p119 = por %p117, %p118
      %p121 = scmp.ne.s32.totalorder %s104, %s120
      %p122 = scmp.eq.s32.totalorder %s18, 0
      %p123 = por %p121, %p122
      %p124 = scmp.le.s32.totalorder 1, %s12
      %p125 = scmp.lt.s32.totalorder %s12, 5
      %p126 = pnand %p124, %p125
      %p127 = pneg %p126
      // Predicated region
      $region9: #{tpu_custom_call.1} parent=5 // pred_check
        _
      $region10: #{tpu_custom_call.1} parent=5 // pred_check_branch
        %129 = sbr.rel (%p126) target = $region12
      $region11: #{tpu_custom_call.1} parent=5 // pred_region
        %s130 = ssub.s32 %s12, 1
      $region12: #{tpu_custom_call.1} parent=5 // pred_fallthru
        _
      %p131 = scmp.lt.s32.totalorder %s12, 4
      // Predicated region
      $region13: #{tpu_custom_call.1} parent=5 // pred_check
        %p132 = pneg %p131
      $region14: #{tpu_custom_call.1} parent=5 // pred_check_branch
        %134 = sbr.rel (%p132) target = $region16
      $region15: #{tpu_custom_call.1} parent=5 // pred_region
        // Predicated region
        $region17: #{tpu_custom_call.1} parent=15 // pred_check
          %p135 = pneg %p32
        $region18: #{tpu_custom_call.1} parent=15 // pred_check_branch
          %137 = sbr.rel (%p135) target = $region20
        $region19: #{tpu_custom_call.1} parent=15 // pred_region
          %p138 = scmp.lt.s32.totalorder %s12, 3
          %s139 = scalar_select %p138, %s12, 3
          %s140 = smul.addr %s139, 2
          %s141 = smul.addr %s140, 8
          %s142 = scalar_lea.vmem %s0, %s141
        $region20: #{tpu_custom_call.1} parent=15 // pred_fallthru
          _
        // Predicated region
        $region21: #{tpu_custom_call.1} parent=15 // pred_check
          %p143 = pneg %p58
        $region22: #{tpu_custom_call.1} parent=15 // pred_check_branch
          %145 = sbr.rel (%p143) target = $region24
        $region23: #{tpu_custom_call.1} parent=15 // pred_region
          %p146 = scmp.lt.s32.totalorder %s12, 3
          %s147 = scalar_select %p146, %s12, 3
          %s148 = smul.addr %s147, 68
          %s149 = smul.addr %s148, 8
          %s150 = scalar_lea.vmem %s1, %s149
        $region24: #{tpu_custom_call.1} parent=15 // pred_fallthru
          _
        // Predicated region
        $region25: #{tpu_custom_call.1} parent=15 // pred_check
          %p151 = pneg %p84
        $region26: #{tpu_custom_call.1} parent=15 // pred_check_branch
          %153 = sbr.rel (%p151) target = $region28
        $region27: #{tpu_custom_call.1} parent=15 // pred_region
          %p154 = scmp.lt.s32.totalorder %s12, 3
          %s155 = scalar_select %p154, %s12, 3
          %s156 = smul.addr %s155, 8
          %s157 = scalar_lea.vmem %s2, %s156
        $region28: #{tpu_custom_call.1} parent=15 // pred_fallthru
          _
      $region16: #{tpu_custom_call.1} parent=5 // pred_fallthru
        _
      %p158 = scmp.le.s32.totalorder 1, %s12
      %p159 = scmp.lt.s32.totalorder %s12, 5
      %p160 = pnand %p158, %p159
      %p161 = pneg %p160
      // Predicated region
      $region29: #{tpu_custom_call.1} parent=5 // pred_check
        _
      $region30: #{tpu_custom_call.1} parent=5 // pred_check_branch
        %163 = sbr.rel (%p160) target = $region32
      $region31: #{tpu_custom_call.1} parent=5 // pred_region
        %s164 = ssub.s32 %s12, 1
        %p165 = scmp.lt.s32.totalorder %s17, 3
        %s166 = scalar_select %p165, %s17, 3
        %s167 = smul.addr %s166, 2
        %s168 = smul.addr %s167, 8
        %s169 = scalar_lea.vmem %s0, %s168
        %p170 = pneg %p38
        %p171 = pneg %p35
        %p172 = scmp.lt.s32.totalorder %s17, 3
        %s173 = scalar_select %p172, %s17, 3
        %s174 = smul.addr %s173, 68
        %s175 = smul.addr %s174, 8
        %s176 = scalar_lea.vmem %s1, %s175
        %p177 = pneg %p64
        %p178 = pneg %p61
        %p179 = scmp.lt.s32.totalorder %s17, 3
        %s180 = scalar_select %p179, %s17, 3
        %s181 = smul.addr %s180, 8
        %s182 = scalar_lea.vmem %s2, %s181
        %p183 = pneg %p90
        %p184 = pneg %p87
        %p185 = pneg %p116
        %p186 = pneg %p113
        %s187 = sand.u32 %s103, 1
        %s188 = scalar_lea.sflag [#allocation3], %s187
        %s189 = sand.u32 %s103, 1
        %s190 = smul.addr %s189, 32
        %s191 = scalar_lea.vmem [#allocation2], %s190
        %p192 = scmp.lt.s32.totalorder %s17, 3
        %s193 = scalar_select %p192, %s17, 3
        %s194 = smul.addr %s193, 2
        %s195 = smul.addr %s194, 8
        %s196 = scalar_lea.vmem %s0, %s195
        %p197 = scmp.lt.s32.totalorder %s17, 3
        %s198 = scalar_select %p197, %s17, 3
        %s199 = smul.addr %s198, 68
        %s200 = smul.addr %s199, 8
        %s201 = scalar_lea.vmem %s1, %s200
        %p202 = scmp.lt.s32.totalorder %s17, 3
        %s203 = scalar_select %p202, %s17, 3
        %s204 = smul.addr %s203, 8
        %s205 = scalar_lea.vmem %s2, %s204
        %v206 = vld [vmem:[%s196] sm:$0xff]
        %v207 = vld [vmem:[%s196 + $0x8] sm:$0xff]
        %v208 = vld [vmem:[%s201] sm:$0xff]
        %v209 = vld [vmem:[%s201 + $0x8] sm:$0xff]
        %v210 = vld [vmem:[%s201 + $0x10] sm:$0xff]
        %v211 = vld [vmem:[%s201 + $0x18] sm:$0xff]
        %v212 = vld [vmem:[%s201 + $0x20] sm:$0xff]
        %v213 = vld [vmem:[%s201 + $0x28] sm:$0xff]
        %v214 = vld [vmem:[%s201 + $0x30] sm:$0xff]
        %v215 = vld [vmem:[%s201 + $0x38] sm:$0xff]
        %v216 = vld [vmem:[%s201 + $0x40] sm:$0xff]
        %v217 = vld [vmem:[%s201 + $0x48] sm:$0xff]
        %v218 = vld [vmem:[%s201 + $0x50] sm:$0xff]
        %v219 = vld [vmem:[%s201 + $0x58] sm:$0xff]
        %v220 = vld [vmem:[%s201 + $0x60] sm:$0xff]
        %v221 = vld [vmem:[%s201 + $0x68] sm:$0xff]
        %v222 = vld [vmem:[%s201 + $0x70] sm:$0xff]
        %v223 = vld [vmem:[%s201 + $0x78] sm:$0xff]
        %v224 = vld [vmem:[%s201 + $0x80] sm:$0xff]
        %v225 = vld [vmem:[%s201 + $0x88] sm:$0xff]
        %v226 = vld [vmem:[%s201 + $0x90] sm:$0xff]
        %v227 = vld [vmem:[%s201 + $0x98] sm:$0xff]
        %v228 = vld [vmem:[%s201 + $0xa0] sm:$0xff]
        %v229 = vld [vmem:[%s201 + $0xa8] sm:$0xff]
        %v230 = vld [vmem:[%s201 + $0xb0] sm:$0xff]
        %v231 = vld [vmem:[%s201 + $0xb8] sm:$0xff]
        %v232 = vld [vmem:[%s201 + $0xc0] sm:$0xff]
        %v233 = vld [vmem:[%s201 + $0xc8] sm:$0xff]
        %v234 = vld [vmem:[%s201 + $0xd0] sm:$0xff]
        %v235 = vld [vmem:[%s201 + $0xd8] sm:$0xff]
        %v236 = vld [vmem:[%s201 + $0xe0] sm:$0xff]
        %v237 = vld [vmem:[%s201 + $0xe8] sm:$0xff]
        %v238 = vld [vmem:[%s201 + $0xf0] sm:$0xff]
        %v239 = vld [vmem:[%s201 + $0xf8] sm:$0xff]
        %v240 = vld [vmem:[%s201 + $0x100] sm:$0xff]
        %v241 = vld [vmem:[%s201 + $0x108] sm:$0xff]
        %v242 = vld [vmem:[%s201 + $0x110] sm:$0xff]
        %v243 = vld [vmem:[%s201 + $0x118] sm:$0xff]
        %v244 = vld [vmem:[%s201 + $0x120] sm:$0xff]
        %v245 = vld [vmem:[%s201 + $0x128] sm:$0xff]
        %v246 = vld [vmem:[%s201 + $0x130] sm:$0xff]
        %v247 = vld [vmem:[%s201 + $0x138] sm:$0xff]
        %v248 = vld [vmem:[%s201 + $0x140] sm:$0xff]
        %v249 = vld [vmem:[%s201 + $0x148] sm:$0xff]
        %v250 = vld [vmem:[%s201 + $0x150] sm:$0xff]
        %v251 = vld [vmem:[%s201 + $0x158] sm:$0xff]
        %v252 = vld [vmem:[%s201 + $0x160] sm:$0xff]
        %v253 = vld [vmem:[%s201 + $0x168] sm:$0xff]
        %v254 = vld [vmem:[%s201 + $0x170] sm:$0xff]
        %v255 = vld [vmem:[%s201 + $0x178] sm:$0xff]
        %v256 = vld [vmem:[%s201 + $0x180] sm:$0xff]
        %v257 = vld [vmem:[%s201 + $0x188] sm:$0xff]
        %v258 = vld [vmem:[%s201 + $0x190] sm:$0xff]
        %v259 = vld [vmem:[%s201 + $0x198] sm:$0xff]
        %v260 = vld [vmem:[%s201 + $0x1a0] sm:$0xff]
        %v261 = vld [vmem:[%s201 + $0x1a8] sm:$0xff]
        %v262 = vld [vmem:[%s201 + $0x1b0] sm:$0xff]
        %v263 = vld [vmem:[%s201 + $0x1b8] sm:$0xff]
        %v264 = vld [vmem:[%s201 + $0x1c0] sm:$0xff]
        %v265 = vld [vmem:[%s201 + $0x1c8] sm:$0xff]
        %v266 = vld [vmem:[%s201 + $0x1d0] sm:$0xff]
        %v267 = vld [vmem:[%s201 + $0x1d8] sm:$0xff]
        %v268 = vld [vmem:[%s201 + $0x1e0] sm:$0xff]
        %v269 = vld [vmem:[%s201 + $0x1e8] sm:$0xff]
        %v270 = vld [vmem:[%s201 + $0x1f0] sm:$0xff]
        %v271 = vld [vmem:[%s201 + $0x1f8] sm:$0xff]
        %v272 = vld [vmem:[%s201 + $0x200] sm:$0xf]
        %v273 = vld [vmem:[%s201 + $0x208] sm:$0xf]
        %v274 = vld [vmem:[%s201 + $0x210] sm:$0xf]
        %v275 = vld [vmem:[%s201 + $0x218] sm:$0xf]
        %v276 = vld [vmem:[%s205] sm:$0xff]
        %278 = vset.pattern.permute.xlu0 0
        %279 = vperm.xlu0 %278, %v276
        %v280 = vpop.permute.xlu0 %279
        %vm282 = vcmask 31744
        %v284 = vsel %vm282, %v207, 0
        %vm286 = vcmask 1043456
        %v288 = vsel %vm286, %v272, 0
        %v291 = vsel %vm286, %v273, 0
        %v294 = vsel %vm286, %v274, 0
        %v297 = vsel %vm286, %v275, 0
        %299 = vmatprep.subr.mxu0 %v209
        %300 = vmatpush1.msra.mxu0 %v208
        %301 = vmatprep.subr.mxu0 %v213
        %302 = vmatpush1.msra.mxu0 %v212
        %303 = vmatprep.subr.mxu0 %v217
        %304 = vmatpush1.msra.mxu0 %v216
        %305 = vmatprep.subr.mxu0 %v221
        %306 = vmatpush1.msra.mxu0 %v220
        %307 = vmatprep.subr.mxu0 %v225
        %308 = vmatpush1.msra.mxu0 %v224
        %309 = vmatprep.subr.mxu0 %v229
        %310 = vmatpush1.msra.mxu0 %v228
        %311 = vmatprep.subr.mxu0 %v233
        %312 = vmatpush1.msra.mxu0 %v232
        %313 = vmatprep.subr.mxu0 %v237
        %314 = vmatpush1.msra.mxu0 %v236
        %315 = vmatprep.subr.mxu0 %v241
        %316 = vmatpush1.msra.mxu0 %v240
        %317 = vmatprep.subr.mxu0 %v245
        %318 = vmatpush1.msra.mxu0 %v244
        %319 = vmatprep.subr.mxu0 %v249
        %320 = vmatpush1.msra.mxu0 %v248
        %321 = vmatprep.subr.mxu0 %v253
        %322 = vmatpush1.msra.mxu0 %v252
        %323 = vmatprep.subr.mxu0 %v257
        %324 = vmatpush1.msra.mxu0 %v256
        %325 = vmatprep.subr.mxu0 %v261
        %326 = vmatpush1.msra.mxu0 %v260
        %327 = vmatprep.subr.mxu0 %v265
        %328 = vmatpush1.msra.mxu0 %v264
        %329 = vmatprep.subr.mxu0 %v269
        %330 = vmatpush1.msra.mxu0 %v268
        %331 = vmatprep.subr.mxu0 %v291
        %332 = vmatpush1.msra.mxu0 %v288
        %333 = vmatprep.subr.mxu0 0.0
        %334 = vmatpush1.msra.mxu0 0.0
        %335 = vmatprep.subr.mxu0 0.0
        %336 = vmatpush1.msra.mxu0 0.0
        %337 = vmatprep.subr.mxu0 0.0
        %338 = vmatpush1.msra.mxu0 0.0
        %339 = vmatprep.subr.mxu0 0.0
        %340 = vmatpush1.msra.mxu0 0.0
        %341 = vmatprep.subr.mxu0 0.0
        %342 = vmatpush1.msra.mxu0 0.0
        %343 = vmatprep.subr.mxu0 0.0
        %344 = vmatpush1.msra.mxu0 0.0
        %345 = vmatprep.subr.mxu0 0.0
        %346 = vmatpush1.msra.mxu0 0.0
        %347 = vmatprep.subr.mxu0 0.0
        %348 = vmatpush1.msra.mxu0 0.0
        %349 = vmatprep.subr.mxu0 0.0
        %350 = vmatpush1.msra.mxu0 0.0
        %351 = vmatprep.subr.mxu0 0.0
        %352 = vmatpush1.msra.mxu0 0.0
        %353 = vmatprep.subr.mxu0 0.0
        %354 = vmatpush1.msra.mxu0 0.0
        %355 = vmatprep.subr.mxu0 0.0
        %356 = vmatpush1.msra.mxu0 0.0
        %357 = vmatprep.subr.mxu0 0.0
        %358 = vmatpush1.msra.mxu0 0.0
        %359 = vmatprep.subr.mxu0 0.0
        %360 = vmatpush1.msra.mxu0 0.0
        %361 = vmatprep.subr.mxu0 0.0
        %362 = vmatpush1.msra.mxu0 0.0
        %363 = vmatprep.mubr.f32.mxu0 %v284
        %364 = vmatmul.mubr.f32.gmra.mrb[0].mxu0 %v206
        %v365 = vpop.f32.mrb[0].mxu0
        %v366 = vadd.f32 %v280, %v365
        %v367 = vpop.f32.mrb[0].mxu0
        %v368 = vadd.f32 %v280, %v367
        %369 = vdwg.mxu0
        %370 = vmatprep.subr.mxu0 %v211
        %371 = vmatpush1.msra.mxu0 %v210
        %372 = vmatprep.subr.mxu0 %v215
        %373 = vmatpush1.msra.mxu0 %v214
        %374 = vmatprep.subr.mxu0 %v219
        %375 = vmatpush1.msra.mxu0 %v218
        %376 = vmatprep.subr.mxu0 %v223
        %377 = vmatpush1.msra.mxu0 %v222
        %378 = vmatprep.subr.mxu0 %v227
        %379 = vmatpush1.msra.mxu0 %v226
        %380 = vmatprep.subr.mxu0 %v231
        %381 = vmatpush1.msra.mxu0 %v230
        %382 = vmatprep.subr.mxu0 %v235
        %383 = vmatpush1.msra.mxu0 %v234
        %384 = vmatprep.subr.mxu0 %v239
        %385 = vmatpush1.msra.mxu0 %v238
        %386 = vmatprep.subr.mxu0 %v243
        %387 = vmatpush1.msra.mxu0 %v242
        %388 = vmatprep.subr.mxu0 %v247
        %389 = vmatpush1.msra.mxu0 %v246
        %390 = vmatprep.subr.mxu0 %v251
        %391 = vmatpush1.msra.mxu0 %v250
        %392 = vmatprep.subr.mxu0 %v255
        %393 = vmatpush1.msra.mxu0 %v254
        %394 = vmatprep.subr.mxu0 %v259
        %395 = vmatpush1.msra.mxu0 %v258
        %396 = vmatprep.subr.mxu0 %v263
        %397 = vmatpush1.msra.mxu0 %v262
        %398 = vmatprep.subr.mxu0 %v267
        %399 = vmatpush1.msra.mxu0 %v266
        %400 = vmatprep.subr.mxu0 %v271
        %401 = vmatpush1.msra.mxu0 %v270
        %402 = vmatprep.subr.mxu0 %v297
        %403 = vmatpush1.msra.mxu0 %v294
        %404 = vmatprep.subr.mxu0 0.0
        %405 = vmatpush1.msra.mxu0 0.0
        %406 = vmatprep.subr.mxu0 0.0
        %407 = vmatpush1.msra.mxu0 0.0
        %408 = vmatprep.subr.mxu0 0.0
        %409 = vmatpush1.msra.mxu0 0.0
        %410 = vmatprep.subr.mxu0 0.0
        %411 = vmatpush1.msra.mxu0 0.0
        %412 = vmatprep.subr.mxu0 0.0
        %413 = vmatpush1.msra.mxu0 0.0
        %414 = vmatprep.subr.mxu0 0.0
        %415 = vmatpush1.msra.mxu0 0.0
        %416 = vmatprep.subr.mxu0 0.0
        %417 = vmatpush1.msra.mxu0 0.0
        %418 = vmatprep.subr.mxu0 0.0
        %419 = vmatpush1.msra.mxu0 0.0
        %420 = vmatprep.subr.mxu0 0.0
        %421 = vmatpush1.msra.mxu0 0.0
        %422 = vmatprep.subr.mxu0 0.0
        %423 = vmatpush1.msra.mxu0 0.0
        %424 = vmatprep.subr.mxu0 0.0
        %425 = vmatpush1.msra.mxu0 0.0
        %426 = vmatprep.subr.mxu0 0.0
        %427 = vmatpush1.msra.mxu0 0.0
        %428 = vmatprep.subr.mxu0 0.0
        %429 = vmatpush1.msra.mxu0 0.0
        %430 = vmatprep.subr.mxu0 0.0
        %431 = vmatpush1.msra.mxu0 0.0
        %432 = vmatprep.subr.mxu0 0.0
        %433 = vmatpush1.msra.mxu0 0.0
        %434 = vmatprep.mubr.f32.mxu0 %v284
        %435 = vmatmul.mubr.f32.gmra.mrb[0].mxu0 %v206
        %v436 = vpop.f32.mrb[0].mxu0
        %v437 = vadd.f32 %v280, %v436
        %v438 = vpop.f32.mrb[0].mxu0
        %v439 = vadd.f32 %v280, %v438
        %440 = vdwg.mxu0
        %v441 = vmax.f32 %v366, 0.0
        %v442 = vmax.f32 %v368, 0.0
        %v443 = vmax.f32 %v437, 0.0
        %v444 = vmax.f32 %v439, 0.0
        %445 = vst [vmem:[%s191] sm:$0xff] %v441
        %446 = vst [vmem:[%s191 + $0x8] sm:$0xff] %v442
        %447 = vst [vmem:[%s191 + $0x10] sm:$0xff] %v443
        %448 = vst [vmem:[%s191 + $0x18] sm:$0xff] %v444
        %s449 = sand.u32 %s103, 1
        %s450 = scalar_lea.sflag [#allocation3], %s449
        %s451 = sand.u32 %s103, 1
        %s452 = smul.addr %s451, 32
        %s453 = scalar_lea.vmem [#allocation2], %s452
        // Predicated region
        $region33: #{tpu_custom_call.1} parent=31 // pred_check
          %p454 = pneg %p113
        $region34: #{tpu_custom_call.1} parent=31 // pred_check_branch
          %456 = sbr.rel (%p454) target = $region36
        $region35: #{tpu_custom_call.1} parent=31 // pred_region
          %s458 = ssub.s32 512, 512
          %459 = vsyncadd %s450, %s458
          %s460 = smul.addr %s17, 4
          %s461 = smul.addr %s460, 128
          %s462 = scalar_lea.hbm %s3, %s461
          %s464 = sshll.u32 %s453, 4
          %s465 = int_to_ptr.vmem [resolvable:$true] %s464
          %467 = dma.vmem_to_hbm [thread:$0]  %s465, 512, %s462, %s450
        $region36: #{tpu_custom_call.1} parent=31 // pred_fallthru
          _
      $region32: #{tpu_custom_call.1} parent=5 // pred_fallthru
        _
      %p468 = scmp.le.s32.totalorder 2, %s12
      // Predicated region
      $region37: #{tpu_custom_call.1} parent=5 // pred_check
        %p469 = pneg %p468
      $region38: #{tpu_custom_call.1} parent=5 // pred_check_branch
        %471 = sbr.rel (%p469) target = $region40
      $region39: #{tpu_custom_call.1} parent=5 // pred_region
        %s472 = ssub.s32 %s12, 2
        // Predicated region
        $region41: #{tpu_custom_call.1} parent=39 // pred_check
          %p473 = pneg %p119
        $region42: #{tpu_custom_call.1} parent=39 // pred_check_branch
          %475 = sbr.rel (%p473) target = $region44
        $region43: #{tpu_custom_call.1} parent=39 // pred_region
          %s476 = sand.u32 %s104, 1
          %s477 = scalar_lea.sflag [#allocation3], %s476
          %s478 = sand.u32 %s104, 1
          %s479 = smul.addr %s478, 32
          %s480 = scalar_lea.vmem [#allocation2], %s479
          %481 = dma.done %s477, 512
        $region44: #{tpu_custom_call.1} parent=39 // pred_fallthru
          _
      $region40: #{tpu_custom_call.1} parent=5 // pred_fallthru
        _
    $region6: #{tpu_custom_call.1} parent=1 // loop_footer
      %s16 = sadd.s32 1, %s12
    $region7: #{tpu_custom_call.1} parent=1 // loop_footer_branch
      %11 = sbr.rel target = $region3
    $region8: #{tpu_custom_call.1} parent=1 // loop_exit
      _
    %482 = vsyncpa [#allocation3], 1
    %s483 = scalar_lea.sflag [#allocation3], 1
    %484 = vsyncpa %s483, 1

</llo_original>
